<compile_context>
chip_gen: v7x
topology: tpu7x:2x2x1
jax: 0.10.0
libtpu: 0.0.40
codegen_flags: <defaults>
</compile_context>

<pallas_src>
import functools

import jax
import jax.numpy as jnp
from jax.experimental import pallas as pl
from jax.experimental.pallas import tpu as pltpu

BN_EPS = 1e-5
LANE = 128  # lane-dense padded feature width


def _round_up(n, m):
    return ((n + m - 1) // m) * m


# ---------------------------------------------------------------------------
# Fused Pallas kernel: whole network in one invocation
# ---------------------------------------------------------------------------
def _fused_mlp_kernel(x_ref, w_ref, aux_ref, o_ref, act_ref):
    # x_ref:   (B, P)    f32   padded input
    # w_ref:   (L, P, P) bf16  stacked, pre-transposed weights (d_in, d_out)
    # aux_ref: (L, 8, P) f32   rows: 0 = bias, 1 = gamma, 2 = beta, 3..7 = 0
    # o_ref:   (B, P)    f32   padded output
    # act_ref: (B, P)    f32   resident activation scratch
    n_layers = w_ref.shape[0]
    inv_b = jnp.float32(1.0 / x_ref.shape[0])
    mm_dtype = w_ref.dtype  # bf16 dot operands, f32 accumulate

    act_ref[...] = x_ref[...]

    def hidden_block(l, carry):
        aux = aux_ref[l]                                   # (8, P) f32
        h = jnp.dot(act_ref[...].astype(mm_dtype), w_ref[l],
                    preferred_element_type=jnp.float32) + aux[0:1, :]
        hr = jnp.maximum(h, 0.0)                           # ReLU
        # BatchNorm1d, training statistics (biased batch var), mean-shifted.
        mean = jnp.sum(hr, axis=0, keepdims=True) * inv_b
        centered = hr - mean
        var = jnp.sum(centered * centered, axis=0, keepdims=True) * inv_b
        hn = centered * jax.lax.rsqrt(var + BN_EPS)
        act_ref[...] = hn * aux[1:2, :] + aux[2:3, :]
        # TODO(synk): Dropout is identity (eval semantics).
        return carry

    # All MLP blocks (Linear+ReLU+BN+Dropout); trip count is static -> unroll.
    jax.lax.fori_loop(0, n_layers - 1, hidden_block, 0, unroll=True)

    # Final plain Linear.
    last = n_layers - 1
    o_ref[...] = (
        jnp.dot(act_ref[...].astype(mm_dtype), w_ref[last],
                preferred_element_type=jnp.float32)
        + aux_ref[last, 0:1, :]
    )


# ---------------------------------------------------------------------------
# Wrapper
# ---------------------------------------------------------------------------
@functools.partial(jax.jit, static_argnames=("d_out",))
def mlp_forward(packed_params, x, d_out):
    w, aux = packed_params            # (L, P, P) bf16, (L, 8, P) f32
    L, P, _ = w.shape
    B = x.shape[0]                    # keep B a multiple of 8 for clean vregs

    # Gridless variant keeps everything VMEM-resident; guard the budget
    # (leave headroom under v7x's 64 MiB physical / 32 MiB scoped default).
    total_bytes = (w.size * w.dtype.itemsize + aux.size * 4 + 3 * B * P * 4)
    assert total_bytes < 24 * 1024 * 1024, (
        "model too large for the gridless fused kernel; use a layer-tiled grid")

    x_pad = jnp.pad(x, ((0, 0), (0, P - x.shape[1])))

    out_pad = pl.pallas_call(
        _fused_mlp_kernel,
        out_shape=jax.ShapeDtypeStruct((B, P), jnp.float32),
        # No grid / no BlockSpecs: every operand is a single full VMEM block.
        scratch_shapes=[pltpu.VMEM((B, P), jnp.float32)],   # resident activation
        compiler_params=pltpu.CompilerParams(
            vmem_limit_bytes=32 * 1024 * 1024,  # explicit; fits v5e/v6e/v7x
        ),
    )(x_pad, w, aux)

    return out_pad[:, :d_out]


# ---------------------------------------------------------------------------
# Parameter init (deterministic, matches PyTorch __init__ shapes/semantics)
# ---------------------------------------------------------------------------
def xavier_uniform(key, d_in, d_out):
    # nn.init.xavier_uniform_ on weight (d_out, d_in); stored transposed
    # as (d_in, d_out).  Bound is symmetric in fan_in/fan_out.
    bound = jnp.sqrt(6.0 / (d_in + d_out))
    return jax.random.uniform(
        key, (d_in, d_out), dtype=jnp.float32, minval=-bound, maxval=bound
    )


def init_mlp_params(key, d_in, d_hidden, d_out, n_blocks):
    params = {}
    key, k = jax.random.split(key)
    params["in_block"] = {
        "w": xavier_uniform(k, d_in, d_hidden),
        "b": jnp.zeros((1, d_hidden), jnp.float32),
        "gamma": jnp.ones((1, d_hidden), jnp.float32),
        "beta": jnp.zeros((1, d_hidden), jnp.float32),
    }
    params["hidden_blocks"] = []
    for _ in range(n_blocks):
        key, k = jax.random.split(key)
        params["hidden_blocks"].append(
            {
                "w": xavier_uniform(k, d_hidden, d_hidden),
                "b": jnp.zeros((1, d_hidden), jnp.float32),
                "gamma": jnp.ones((1, d_hidden), jnp.float32),
                "beta": jnp.zeros((1, d_hidden), jnp.float32),
            }
        )
    key, k = jax.random.split(key)
    params["out_block"] = {
        "w": xavier_uniform(k, d_hidden, d_out),
        "b": jnp.zeros((1, d_out), jnp.float32),
    }
    return params


def pack_params(params, weight_dtype=jnp.bfloat16):
    """Pad every layer to (P, P) lanes, stack over layers, and merge
    bias/gamma/beta into one sublane-padded (L, 8, P) tensor."""
    blocks = [params["in_block"]] + params["hidden_blocks"]
    ob = params["out_block"]
    dims = ([blocks[0]["w"].shape[0]]
            + [b["w"].shape[1] for b in blocks]
            + [ob["w"].shape[1]])
    P = max(_round_up(max(dims), LANE), LANE)

    def pad2(a, rows, cols):
        return jnp.pad(a, ((0, rows - a.shape[0]), (0, cols - a.shape[1])))

    def make_aux(b, gamma=None, beta=None):
        aux = jnp.zeros((8, P), jnp.float32)
        aux = aux.at[0, : b.shape[1]].set(b[0])
        if gamma is not None:
            aux = aux.at[1, : gamma.shape[1]].set(gamma[0])  # padded gamma = 0
        if beta is not None:
            aux = aux.at[2, : beta.shape[1]].set(beta[0])
        return aux

    ws, auxs = [], []
    for blk in blocks:
        ws.append(pad2(blk["w"], P, P).astype(weight_dtype))
        auxs.append(make_aux(blk["b"], blk["gamma"], blk["beta"]))
    ws.append(pad2(ob["w"], P, P).astype(weight_dtype))
    auxs.append(make_aux(ob["b"]))

    return jnp.stack(ws), jnp.stack(auxs)


# ---------------------------------------------------------------------------
# Pure-JAX reference (same math) for correctness check
# ---------------------------------------------------------------------------
def mlp_reference(params, x, weight_dtype=jnp.float32):
    """weight_dtype=bfloat16 reproduces the kernel's weight-storage precision
    exactly (matmul operands bf16, f32 accumulate, all BN math f32)."""
    def linear(x, w, b):
        return jnp.dot(x.astype(weight_dtype), w.astype(weight_dtype),
                       preferred_element_type=jnp.float32) + b

    def block(p, x):
        h = jnp.maximum(linear(x, p["w"], p["b"]), 0.0)
        mean = jnp.mean(h, axis=0, keepdims=True)
        var = jnp.mean((h - mean) ** 2, axis=0, keepdims=True)
        return (h - mean) * jax.lax.rsqrt(var + BN_EPS) * p["gamma"] + p["beta"]

    x = block(params["in_block"], x)
    for p in params["hidden_blocks"]:
        x = block(p, x)
    p = params["out_block"]
    return linear(x, p["w"], p["b"])


if __name__ == "__main__":
    B, D_IN, D_HIDDEN, D_OUT, N_BLOCKS = 8, 32, 32, 16, 2

    key = jax.random.PRNGKey(0)
    key_x, key_p = jax.random.split(key)

    x = jax.random.normal(key_x, (B, D_IN), dtype=jnp.float32)
    params = init_mlp_params(key_p, D_IN, D_HIDDEN, D_OUT, N_BLOCKS)
    packed = pack_params(params)                      # bf16 weights

    out = mlp_forward(packed, x, D_OUT)
    jax.block_until_ready(out)

    assert out.shape == (B, D_OUT), out.shape
    assert bool(jnp.all(jnp.isfinite(out)))

    # Exact-math check: reference with the same bf16 weight storage.
    ref_bf16 = mlp_reference(params, x, weight_dtype=jnp.bfloat16)
    assert jnp.allclose(out, ref_bf16, rtol=2e-3, atol=2e-3), (
        float(jnp.max(jnp.abs(out - ref_bf16))))

    # Semantic sanity check vs the full-f32 spec (loose tolerance accounts for
    # intentional bf16 weight storage across 4 layers).
    ref_f32 = mlp_reference(params, x, weight_dtype=jnp.float32)
    assert jnp.allclose(out, ref_f32, rtol=5e-2, atol=2e-1), (
        float(jnp.max(jnp.abs(out - ref_f32))))

    print("KERNEL_OK")
</pallas_src>

<mosaic_0001>
module attributes {stable_mosaic.version = 11 : i64} {
  func.func @_fused_mlp_kernel(%arg0: memref<8x128xf32, #tpu.memory_space<vmem>>, %arg1: memref<4x128x128xbf16, #tpu.memory_space<vmem>>, %arg2: memref<4x8x128xf32, #tpu.memory_space<vmem>>, %arg3: memref<8x128xf32, #tpu.memory_space<vmem>>, %arg4: memref<8x128xf32, #tpu.memory_space<vmem>>) attributes {dimension_semantics = [], scalar_prefetch = 0 : i64, scratch_operands = 1 : i64, tpu.core_type = #tpu.core_type<tc>} {
    %c0 = arith.constant 0 : index
    %c0_0 = arith.constant 0 : index
    %0 = vector.load %arg0[%c0, %c0_0] : memref<8x128xf32, #tpu.memory_space<vmem>>, vector<8x128xf32>
    %c0_1 = arith.constant 0 : index
    %c0_2 = arith.constant 0 : index
    %1 = vector.load %arg4[%c0_1, %c0_2] : memref<8x128xf32, #tpu.memory_space<vmem>>, vector<8x128xf32>
    tpu.vector_store %arg4[%c0_1, %c0_2], %0 {strides = array<i32>} : memref<8x128xf32, #tpu.memory_space<vmem>>, vector<8x128xf32>,
    %cst = arith.constant 1.250000e-01 : f32
    %c0_i32 = arith.constant 0 : i32
    %2 = arith.index_cast %c0_i32 : i32 to index
    %c0_3 = arith.constant 0 : index
    %c0_4 = arith.constant 0 : index
    %3 = vector.load %arg2[%2, %c0_3, %c0_4] : memref<4x8x128xf32, #tpu.memory_space<vmem>>, vector<1x8x128xf32>
    %4 = vector.shape_cast %3 : vector<1x8x128xf32> to vector<8x128xf32>
    %c0_5 = arith.constant 0 : index
    %c0_6 = arith.constant 0 : index
    %5 = vector.load %arg4[%c0_5, %c0_6] : memref<8x128xf32, #tpu.memory_space<vmem>>, vector<8x128xf32>
    %6 = arith.truncf %5 : vector<8x128xf32> to vector<8x128xbf16>
    %7 = arith.index_cast %c0_i32 : i32 to index
    %c0_7 = arith.constant 0 : index
    %c0_8 = arith.constant 0 : index
    %8 = vector.load %arg1[%7, %c0_7, %c0_8] : memref<4x128x128xbf16, #tpu.memory_space<vmem>>, vector<1x128x128xbf16>
    %9 = vector.shape_cast %8 : vector<1x128x128xbf16> to vector<128x128xbf16>
    %cst_9 = arith.constant dense<0.000000e+00> : vector<8x128xf32>
    %10 = tpu.matmul %6, %9, %cst_9 {dimension_numbers = #tpu.dot_dimension_numbers<[1], [0], [0], [1], [0, 0, 1, 1], [], []>} : vector<8x128xbf16>, vector<128x128xbf16>, vector<8x128xf32> -> vector<8x128xf32>
    %11 = vector.extract_strided_slice %4 {offsets = [0, 0], sizes = [1, 128], strides = [1, 1]} : vector<8x128xf32> to vector<1x128xf32>
    %12 = vector.broadcast %11 : vector<1x128xf32> to vector<8x128xf32>
    %13 = arith.addf %10, %12 : vector<8x128xf32>
    %cst_10 = arith.constant 0.000000e+00 : f32
    %14 = vector.broadcast %cst_10 : f32 to vector<8x128xf32>
    %15 = arith.maximumf %13, %14 : vector<8x128xf32>
    %cst_11 = arith.constant dense<0.000000e+00> : vector<128xf32>
    %16 = vector.multi_reduction <add>, %15, %cst_11 [0] : vector<8x128xf32> to vector<128xf32>
    %17 = vector.shape_cast %16 : vector<128xf32> to vector<1x128xf32>
    %18 = vector.broadcast %cst : f32 to vector<1x128xf32>
    %19 = arith.mulf %17, %18 : vector<1x128xf32>
    %20 = vector.broadcast %19 : vector<1x128xf32> to vector<8x128xf32>
    %21 = arith.subf %15, %20 : vector<8x128xf32>
    %22 = arith.mulf %21, %21 : vector<8x128xf32>
    %cst_12 = arith.constant dense<0.000000e+00> : vector<128xf32>
    %23 = vector.multi_reduction <add>, %22, %cst_12 [0] : vector<8x128xf32> to vector<128xf32>
    %24 = vector.shape_cast %23 : vector<128xf32> to vector<1x128xf32>
    %25 = vector.broadcast %cst : f32 to vector<1x128xf32>
    %26 = arith.mulf %24, %25 : vector<1x128xf32>
    %cst_13 = arith.constant 9.99999974E-6 : f32
    %27 = vector.broadcast %cst_13 : f32 to vector<1x128xf32>
    %28 = arith.addf %26, %27 : vector<1x128xf32>
    %29 = math.rsqrt %28 : vector<1x128xf32>
    %30 = vector.broadcast %29 : vector<1x128xf32> to vector<8x128xf32>
    %31 = arith.mulf %21, %30 : vector<8x128xf32>
    %32 = vector.extract_strided_slice %4 {offsets = [1, 0], sizes = [1, 128], strides = [1, 1]} : vector<8x128xf32> to vector<1x128xf32>
    %33 = vector.broadcast %32 : vector<1x128xf32> to vector<8x128xf32>
    %34 = arith.mulf %31, %33 : vector<8x128xf32>
    %35 = vector.extract_strided_slice %4 {offsets = [2, 0], sizes = [1, 128], strides = [1, 1]} : vector<8x128xf32> to vector<1x128xf32>
    %36 = vector.broadcast %35 : vector<1x128xf32> to vector<8x128xf32>
    %37 = arith.addf %34, %36 : vector<8x128xf32>
    %c0_14 = arith.constant 0 : index
    %c0_15 = arith.constant 0 : index
    %38 = vector.load %arg4[%c0_14, %c0_15] : memref<8x128xf32, #tpu.memory_space<vmem>>, vector<8x128xf32>
    tpu.vector_store %arg4[%c0_14, %c0_15], %37 {strides = array<i32>} : memref<8x128xf32, #tpu.memory_space<vmem>>, vector<8x128xf32>,
    %c1_i32 = arith.constant 1 : i32
    %39 = arith.index_cast %c1_i32 : i32 to index
    %c0_16 = arith.constant 0 : index
    %c0_17 = arith.constant 0 : index
    %40 = vector.load %arg2[%39, %c0_16, %c0_17] : memref<4x8x128xf32, #tpu.memory_space<vmem>>, vector<1x8x128xf32>
    %41 = vector.shape_cast %40 : vector<1x8x128xf32> to vector<8x128xf32>
    %c0_18 = arith.constant 0 : index
    %c0_19 = arith.constant 0 : index
    %42 = vector.load %arg4[%c0_18, %c0_19] : memref<8x128xf32, #tpu.memory_space<vmem>>, vector<8x128xf32>
    %43 = arith.truncf %42 : vector<8x128xf32> to vector<8x128xbf16>
    %44 = arith.index_cast %c1_i32 : i32 to index
    %c0_20 = arith.constant 0 : index
    %c0_21 = arith.constant 0 : index
    %45 = vector.load %arg1[%44, %c0_20, %c0_21] : memref<4x128x128xbf16, #tpu.memory_space<vmem>>, vector<1x128x128xbf16>
    %46 = vector.shape_cast %45 : vector<1x128x128xbf16> to vector<128x128xbf16>
    %cst_22 = arith.constant dense<0.000000e+00> : vector<8x128xf32>
    %47 = tpu.matmul %43, %46, %cst_22 {dimension_numbers = #tpu.dot_dimension_numbers<[1], [0], [0], [1], [0, 0, 1, 1], [], []>} : vector<8x128xbf16>, vector<128x128xbf16>, vector<8x128xf32> -> vector<8x128xf32>
    %48 = vector.extract_strided_slice %41 {offsets = [0, 0], sizes = [1, 128], strides = [1, 1]} : vector<8x128xf32> to vector<1x128xf32>
    %49 = vector.broadcast %48 : vector<1x128xf32> to vector<8x128xf32>
    %50 = arith.addf %47, %49 : vector<8x128xf32>
    %cst_23 = arith.constant 0.000000e+00 : f32
    %51 = vector.broadcast %cst_23 : f32 to vector<8x128xf32>
    %52 = arith.maximumf %50, %51 : vector<8x128xf32>
    %cst_24 = arith.constant dense<0.000000e+00> : vector<128xf32>
    %53 = vector.multi_reduction <add>, %52, %cst_24 [0] : vector<8x128xf32> to vector<128xf32>
    %54 = vector.shape_cast %53 : vector<128xf32> to vector<1x128xf32>
    %55 = vector.broadcast %cst : f32 to vector<1x128xf32>
    %56 = arith.mulf %54, %55 : vector<1x128xf32>
    %57 = vector.broadcast %56 : vector<1x128xf32> to vector<8x128xf32>
    %58 = arith.subf %52, %57 : vector<8x128xf32>
    %59 = arith.mulf %58, %58 : vector<8x128xf32>
    %cst_25 = arith.constant dense<0.000000e+00> : vector<128xf32>
    %60 = vector.multi_reduction <add>, %59, %cst_25 [0] : vector<8x128xf32> to vector<128xf32>
    %61 = vector.shape_cast %60 : vector<128xf32> to vector<1x128xf32>
    %62 = vector.broadcast %cst : f32 to vector<1x128xf32>
    %63 = arith.mulf %61, %62 : vector<1x128xf32>
    %cst_26 = arith.constant 9.99999974E-6 : f32
    %64 = vector.broadcast %cst_26 : f32 to vector<1x128xf32>
    %65 = arith.addf %63, %64 : vector<1x128xf32>
    %66 = math.rsqrt %65 : vector<1x128xf32>
    %67 = vector.broadcast %66 : vector<1x128xf32> to vector<8x128xf32>
    %68 = arith.mulf %58, %67 : vector<8x128xf32>
    %69 = vector.extract_strided_slice %41 {offsets = [1, 0], sizes = [1, 128], strides = [1, 1]} : vector<8x128xf32> to vector<1x128xf32>
    %70 = vector.broadcast %69 : vector<1x128xf32> to vector<8x128xf32>
    %71 = arith.mulf %68, %70 : vector<8x128xf32>
    %72 = vector.extract_strided_slice %41 {offsets = [2, 0], sizes = [1, 128], strides = [1, 1]} : vector<8x128xf32> to vector<1x128xf32>
    %73 = vector.broadcast %72 : vector<1x128xf32> to vector<8x128xf32>
    %74 = arith.addf %71, %73 : vector<8x128xf32>
    %c0_27 = arith.constant 0 : index
    %c0_28 = arith.constant 0 : index
    %75 = vector.load %arg4[%c0_27, %c0_28] : memref<8x128xf32, #tpu.memory_space<vmem>>, vector<8x128xf32>
    tpu.vector_store %arg4[%c0_27, %c0_28], %74 {strides = array<i32>} : memref<8x128xf32, #tpu.memory_space<vmem>>, vector<8x128xf32>,
    %c2_i32 = arith.constant 2 : i32
    %76 = arith.index_cast %c2_i32 : i32 to index
    %c0_29 = arith.constant 0 : index
    %c0_30 = arith.constant 0 : index
    %77 = vector.load %arg2[%76, %c0_29, %c0_30] : memref<4x8x128xf32, #tpu.memory_space<vmem>>, vector<1x8x128xf32>
    %78 = vector.shape_cast %77 : vector<1x8x128xf32> to vector<8x128xf32>
    %c0_31 = arith.constant 0 : index
    %c0_32 = arith.constant 0 : index
    %79 = vector.load %arg4[%c0_31, %c0_32] : memref<8x128xf32, #tpu.memory_space<vmem>>, vector<8x128xf32>
    %80 = arith.truncf %79 : vector<8x128xf32> to vector<8x128xbf16>
    %81 = arith.index_cast %c2_i32 : i32 to index
    %c0_33 = arith.constant 0 : index
    %c0_34 = arith.constant 0 : index
    %82 = vector.load %arg1[%81, %c0_33, %c0_34] : memref<4x128x128xbf16, #tpu.memory_space<vmem>>, vector<1x128x128xbf16>
    %83 = vector.shape_cast %82 : vector<1x128x128xbf16> to vector<128x128xbf16>
    %cst_35 = arith.constant dense<0.000000e+00> : vector<8x128xf32>
    %84 = tpu.matmul %80, %83, %cst_35 {dimension_numbers = #tpu.dot_dimension_numbers<[1], [0], [0], [1], [0, 0, 1, 1], [], []>} : vector<8x128xbf16>, vector<128x128xbf16>, vector<8x128xf32> -> vector<8x128xf32>
    %85 = vector.extract_strided_slice %78 {offsets = [0, 0], sizes = [1, 128], strides = [1, 1]} : vector<8x128xf32> to vector<1x128xf32>
    %86 = vector.broadcast %85 : vector<1x128xf32> to vector<8x128xf32>
    %87 = arith.addf %84, %86 : vector<8x128xf32>
    %cst_36 = arith.constant 0.000000e+00 : f32
    %88 = vector.broadcast %cst_36 : f32 to vector<8x128xf32>
    %89 = arith.maximumf %87, %88 : vector<8x128xf32>
    %cst_37 = arith.constant dense<0.000000e+00> : vector<128xf32>
    %90 = vector.multi_reduction <add>, %89, %cst_37 [0] : vector<8x128xf32> to vector<128xf32>
    %91 = vector.shape_cast %90 : vector<128xf32> to vector<1x128xf32>
    %92 = vector.broadcast %cst : f32 to vector<1x128xf32>
    %93 = arith.mulf %91, %92 : vector<1x128xf32>
    %94 = vector.broadcast %93 : vector<1x128xf32> to vector<8x128xf32>
    %95 = arith.subf %89, %94 : vector<8x128xf32>
    %96 = arith.mulf %95, %95 : vector<8x128xf32>
    %cst_38 = arith.constant dense<0.000000e+00> : vector<128xf32>
    %97 = vector.multi_reduction <add>, %96, %cst_38 [0] : vector<8x128xf32> to vector<128xf32>
    %98 = vector.shape_cast %97 : vector<128xf32> to vector<1x128xf32>
    %99 = vector.broadcast %cst : f32 to vector<1x128xf32>
    %100 = arith.mulf %98, %99 : vector<1x128xf32>
    %cst_39 = arith.constant 9.99999974E-6 : f32
    %101 = vector.broadcast %cst_39 : f32 to vector<1x128xf32>
    %102 = arith.addf %100, %101 : vector<1x128xf32>
    %103 = math.rsqrt %102 : vector<1x128xf32>
    %104 = vector.broadcast %103 : vector<1x128xf32> to vector<8x128xf32>
    %105 = arith.mulf %95, %104 : vector<8x128xf32>
    %106 = vector.extract_strided_slice %78 {offsets = [1, 0], sizes = [1, 128], strides = [1, 1]} : vector<8x128xf32> to vector<1x128xf32>
    %107 = vector.broadcast %106 : vector<1x128xf32> to vector<8x128xf32>
    %108 = arith.mulf %105, %107 : vector<8x128xf32>
    %109 = vector.extract_strided_slice %78 {offsets = [2, 0], sizes = [1, 128], strides = [1, 1]} : vector<8x128xf32> to vector<1x128xf32>
    %110 = vector.broadcast %109 : vector<1x128xf32> to vector<8x128xf32>
    %111 = arith.addf %108, %110 : vector<8x128xf32>
    %c0_40 = arith.constant 0 : index
    %c0_41 = arith.constant 0 : index
    %112 = vector.load %arg4[%c0_40, %c0_41] : memref<8x128xf32, #tpu.memory_space<vmem>>, vector<8x128xf32>
    tpu.vector_store %arg4[%c0_40, %c0_41], %111 {strides = array<i32>} : memref<8x128xf32, #tpu.memory_space<vmem>>, vector<8x128xf32>,
    %c3_i32 = arith.constant 3 : i32
    %c0_42 = arith.constant 0 : index
    %c0_43 = arith.constant 0 : index
    %113 = vector.load %arg4[%c0_42, %c0_43] : memref<8x128xf32, #tpu.memory_space<vmem>>, vector<8x128xf32>
    %114 = arith.truncf %113 : vector<8x128xf32> to vector<8x128xbf16>
    %c3 = arith.constant 3 : index
    %c0_44 = arith.constant 0 : index
    %c0_45 = arith.constant 0 : index
    %115 = vector.load %arg1[%c3, %c0_44, %c0_45] : memref<4x128x128xbf16, #tpu.memory_space<vmem>>, vector<1x128x128xbf16>
    %116 = vector.shape_cast %115 : vector<1x128x128xbf16> to vector<128x128xbf16>
    %cst_46 = arith.constant dense<0.000000e+00> : vector<8x128xf32>
    %117 = tpu.matmul %114, %116, %cst_46 {dimension_numbers = #tpu.dot_dimension_numbers<[1], [0], [0], [1], [0, 0, 1, 1], [], []>} : vector<8x128xbf16>, vector<128x128xbf16>, vector<8x128xf32> -> vector<8x128xf32>
    %c3_47 = arith.constant 3 : index
    %c0_48 = arith.constant 0 : index
    %c0_49 = arith.constant 0 : index
    %118 = vector.load %arg2[%c3_47, %c0_48, %c0_49] : memref<4x8x128xf32, #tpu.memory_space<vmem>>, vector<1x1x128xf32>
    %119 = vector.shape_cast %118 : vector<1x1x128xf32> to vector<1x128xf32>
    %120 = vector.broadcast %119 : vector<1x128xf32> to vector<8x128xf32>
    %121 = arith.addf %117, %120 : vector<8x128xf32>
    %c0_50 = arith.constant 0 : index
    %c0_51 = arith.constant 0 : index
    %122 = vector.load %arg3[%c0_50, %c0_51] : memref<8x128xf32, #tpu.memory_space<vmem>>, vector<8x128xf32>
    tpu.vector_store %arg3[%c0_50, %c0_51], %121 {strides = array<i32>} : memref<8x128xf32, #tpu.memory_space<vmem>>, vector<8x128xf32>,
    return
  }
}

</mosaic_0001>

<llo_original>
// kernel: mlp_forward.1
$region0: #{mlp_forward.1}
  #allocation0 [shape = 'u32[]', space=smem, size = 0x4, offset = 0x4, fixed_abs, tag = 'smem constant byte address 0x4 - core index']
  #allocation1 [shape = 'u32[144,128]{1,0:T(1,128)}', space=vmem, size = 0x12000, scoped, tag = 'internal scratch']
  #allocation2 [shape = 'f32[8,128]{1,0:T(8,128)}', space=vmem, size = 0x1000, scoped, tag = 'scratch operand']
  %s0 = inlined_call_operand.vmem [shape: f32[8,128], index: 0, kind: input, shape index: {}]
  %s1 = inlined_call_operand.hbm [shape: bf16[4,128,128], index: 1, kind: input, shape index: {}]
  %s2 = inlined_call_operand.hbm [shape: f32[4,8,128], index: 2, kind: input, shape index: {}]
  %s3 = inlined_call_operand.hbm [shape: f32[8,128], index: 3, kind: output, shape index: {}]
  %s4 = sld [smem:[#allocation0]]
  $region30: #{mlp_forward.1} parent=0
    _
  %s6 = ssub.s32 1, %s4
  %s7 = scalar_select 0, %s6, %s4
  $region1: #{mlp_forward.1} parent=0
    #allocation3 [shape = 'u8[131072]{0}', space=vmem, size = 0x20000, scoped, tag = 'input window, operand 1, single buffered']
    #allocation4 [shape = 's32[1]{0}', space=sflag, size = 0x4, scoped, tag = 'scoped memory for mlp_forward.1']
    #allocation5 [shape = 's32[1]{0}', space=sflag, size = 0x4, scoped, tag = 'scoped memory for mlp_forward.1']
    #allocation6 [shape = 'u8[16384]{0}', space=vmem, size = 0x4000, scoped, tag = 'input window, operand 2, single buffered']
    #allocation7 [shape = 's32[1]{0}', space=sflag, size = 0x4, scoped, tag = 'scoped memory for mlp_forward.1']
    #allocation8 [shape = 'u8[4096]{0}', space=vmem, size = 0x1000, scoped, tag = 'output window, operand 0, single buffered']
    %8 = vsyncpa [#allocation4], 0
    %9 = vsyncpa [#allocation7], 0
    %10 = vsyncpa [#allocation5], 0
    // Predicated region
    $region2: #{mlp_forward.1} parent=1 // pred_check
      _
    $region3: #{mlp_forward.1} parent=1 // pred_check_branch
      %12 = sbr.rel (0) target = $region5
    $region4: #{mlp_forward.1} parent=1 // pred_region
      _
    $region5: #{mlp_forward.1} parent=1 // pred_fallthru
      _
    // Predicated region
    $region6: #{mlp_forward.1} parent=1 // pred_check
      _
    $region7: #{mlp_forward.1} parent=1 // pred_check_branch
      %14 = sbr.rel (0) target = $region9
    $region8: #{mlp_forward.1} parent=1 // pred_region
      %s16 = ssub.s32 4096, 4096
      %17 = vsyncadd [#allocation4], %s16
      %s18 = sshll.u32 [#allocation3], 4
      %s19 = int_to_ptr.vmem [resolvable:$true] %s18
      %24 = dma.hbm_to_vmem [thread:$0]  %s1, 4096, %s19, [#allocation4], 64, 64, 4
    $region9: #{mlp_forward.1} parent=1 // pred_fallthru
      _
    // Predicated region
    $region10: #{mlp_forward.1} parent=1 // pred_check
      _
    $region11: #{mlp_forward.1} parent=1 // pred_check_branch
      %26 = sbr.rel (0) target = $region13
    $region12: #{mlp_forward.1} parent=1 // pred_region
      %s28 = ssub.s32 512, 512
      %29 = vsyncadd [#allocation7], %s28
      %s30 = sshll.u32 [#allocation6], 4
      %s31 = int_to_ptr.vmem [resolvable:$true] %s30
      %36 = dma.hbm_to_vmem [thread:$0]  %s2, 512, %s31, [#allocation7], 128, 128, 8
    $region13: #{mlp_forward.1} parent=1 // pred_fallthru
      _
    // Predicated region
    $region14: #{mlp_forward.1} parent=1 // pred_check
      _
    $region15: #{mlp_forward.1} parent=1 // pred_check_branch
      %38 = sbr.rel (0) target = $region17
    $region16: #{mlp_forward.1} parent=1 // pred_region
      %39 = dma.done [#allocation4], 4096
    $region17: #{mlp_forward.1} parent=1 // pred_fallthru
      _
    // Predicated region
    $region18: #{mlp_forward.1} parent=1 // pred_check
      _
    $region19: #{mlp_forward.1} parent=1 // pred_check_branch
      %41 = sbr.rel (0) target = $region21
    $region20: #{mlp_forward.1} parent=1 // pred_region
      %42 = dma.done [#allocation7], 512
    $region21: #{mlp_forward.1} parent=1 // pred_fallthru
      _
    %v44 = vld [vmem:[%s0] sm:$0xff]
    %45 = vst [vmem:[#allocation2] sm:$0xff] %v44
    %v46 = vld [vmem:[#allocation6] sm:$0xff]
    %v47 = vld [vmem:[#allocation2] sm:$0xff]
    %v48 = vpack.c.bf16 %v47, %v47
    %v49 = vld [vmem:[#allocation3] sm:$0xf]
    %v50 = vld [vmem:[#allocation3 + $0x4] sm:$0xf]
    %v51 = vld [vmem:[#allocation3 + $0x8] sm:$0xf]
    %v52 = vld [vmem:[#allocation3 + $0xc] sm:$0xf]
    %v53 = vld [vmem:[#allocation3 + $0x10] sm:$0xf]
    %v54 = vld [vmem:[#allocation3 + $0x14] sm:$0xf]
    %v55 = vld [vmem:[#allocation3 + $0x18] sm:$0xf]
    %v56 = vld [vmem:[#allocation3 + $0x1c] sm:$0xf]
    %v57 = vld [vmem:[#allocation3 + $0x20] sm:$0xf]
    %v58 = vld [vmem:[#allocation3 + $0x24] sm:$0xf]
    %v59 = vld [vmem:[#allocation3 + $0x28] sm:$0xf]
    %v60 = vld [vmem:[#allocation3 + $0x2c] sm:$0xf]
    %v61 = vld [vmem:[#allocation3 + $0x30] sm:$0xf]
    %v62 = vld [vmem:[#allocation3 + $0x34] sm:$0xf]
    %v63 = vld [vmem:[#allocation3 + $0x38] sm:$0xf]
    %v64 = vld [vmem:[#allocation3 + $0x3c] sm:$0xf]
    %v65 = vlaneseq
    %v66 = vshrl.u32 %v65, 7
    %v67 = vsub.s32 0, %v66
    %v68 = vrot.slane %v46, %v67
    %v85 = vunpack.c.l.b16 %v49
    %v86 = vunpack.c.l.b16 %v50
    %v87 = vunpack.c.l.b16 %v51
    %v88 = vunpack.c.l.b16 %v52
    %v89 = vunpack.c.l.b16 %v53
    %v90 = vunpack.c.l.b16 %v54
    %v91 = vunpack.c.l.b16 %v55
    %v92 = vunpack.c.l.b16 %v56
    %v93 = vunpack.c.l.b16 %v57
    %v94 = vunpack.c.l.b16 %v58
    %v95 = vunpack.c.l.b16 %v59
    %v96 = vunpack.c.l.b16 %v60
    %v97 = vunpack.c.l.b16 %v61
    %v98 = vunpack.c.l.b16 %v62
    %v99 = vunpack.c.l.b16 %v63
    %v100 = vunpack.c.l.b16 %v64
    %v101 = vpack.c.b16 %v86, %v85
    %v102 = vpack.c.b16 %v88, %v87
    %v103 = vpack.c.b16 %v90, %v89
    %v104 = vpack.c.b16 %v92, %v91
    %v105 = vpack.c.b16 %v94, %v93
    %v106 = vpack.c.b16 %v96, %v95
    %v107 = vpack.c.b16 %v98, %v97
    %v108 = vpack.c.b16 %v100, %v99
    %117 = vmatprep.subr.bf16.mxu0 0
    %118 = vmatpush1.bf16.msra.mxu0 %v101
    %119 = vmatprep.subr.bf16.mxu0 0
    %120 = vmatpush1.bf16.msra.mxu0 %v102
    %121 = vmatprep.subr.bf16.mxu0 0
    %122 = vmatpush1.bf16.msra.mxu0 %v103
    %123 = vmatprep.subr.bf16.mxu0 0
    %124 = vmatpush1.bf16.msra.mxu0 %v104
    %125 = vmatprep.subr.bf16.mxu0 0
    %126 = vmatpush1.bf16.msra.mxu0 %v105
    %127 = vmatprep.subr.bf16.mxu0 0
    %128 = vmatpush1.bf16.msra.mxu0 %v106
    %129 = vmatprep.subr.bf16.mxu0 0
    %130 = vmatpush1.bf16.msra.mxu0 %v107
    %131 = vmatprep.subr.bf16.mxu0 0
    %132 = vmatpush1.bf16.msra.mxu0 %v108
    %133 = vmatprep.subr.bf16.mxu0 0
    %134 = vmatpush1.bf16.msra.mxu0 0
    %135 = vmatprep.subr.bf16.mxu0 0
    %136 = vmatpush1.bf16.msra.mxu0 0
    %137 = vmatprep.subr.bf16.mxu0 0
    %138 = vmatpush1.bf16.msra.mxu0 0
    %139 = vmatprep.subr.bf16.mxu0 0
    %140 = vmatpush1.bf16.msra.mxu0 0
    %141 = vmatprep.subr.bf16.mxu0 0
    %142 = vmatpush1.bf16.msra.mxu0 0
    %143 = vmatprep.subr.bf16.mxu0 0
    %144 = vmatpush1.bf16.msra.mxu0 0
    %145 = vmatprep.subr.bf16.mxu0 0
    %146 = vmatpush1.bf16.msra.mxu0 0
    %147 = vmatprep.subr.bf16.mxu0 0
    %148 = vmatpush1.bf16.msra.mxu0 0
    %149 = vmatprep.mubr.bf16.mxu0 0
    %150 = vmatmul.mubr.bf16.gmra.mrb[0].mxu0 %v48
    %v151 = vpop.f32.mrb[0].mxu0
    %v152 = vadd.f32 %v68, %v151
    %v153 = vpop.f32.mrb[0].mxu0
    %v154 = vpop.f32.mrb[0].mxu0
    %v155 = vpop.f32.mrb[0].mxu0
    %156 = vdwg.mxu0
    %v157 = vmax.f32 %v152, 0.0
    %v158 = vrot.slane %v157, 4
    %v159 = vadd.f32 %v157, %v158
    %v160 = vrot.slane %v159, 2
    %v161 = vadd.f32 %v159, %v160
    %v162 = vrot.slane %v161, 1
    %v163 = vadd.f32 %v161, %v162
    %v164 = vmul.f32 %v163, 0.125
    %v165 = vsub.f32 %v157, %v164
    %v166 = vmul.f32 %v165, %v165
    %v167 = vrot.slane %v166, 4
    %v168 = vadd.f32 %v166, %v167
    %v169 = vrot.slane %v168, 2
    %v170 = vadd.f32 %v168, %v169
    %v171 = vrot.slane %v170, 1
    %v172 = vadd.f32 %v170, %v171
    %v173 = vmul.f32 %v172, 0.125
    %v174 = vadd.f32 %v173, 1e-05
    %v175 = vrsqrt.pop %v174
    %v176 = vmul.f32 %v165, %v175
    %v177 = vlaneseq
    %v178 = vshrl.u32 %v177, 7
    %v179 = vsub.s32 1, %v178
    %v180 = vrot.slane %v46, %v179
    %v181 = vmul.f32 %v176, %v180
    %v182 = vlaneseq
    %v183 = vshrl.u32 %v182, 7
    %v184 = vsub.s32 2, %v183
    %v185 = vrot.slane %v46, %v184
    %v186 = vadd.f32 %v181, %v185
    %187 = vst [vmem:[#allocation2] sm:$0xff] %v186
    %s188 = scalar_lea.vmem [#allocation6], 8
    %v189 = vld [vmem:[%s188] sm:$0xff]
    %v190 = vld [vmem:[#allocation2] sm:$0xff]
    %v191 = vpack.c.bf16 %v190, %v190
    %s192 = scalar_lea.vmem [#allocation3], 64
    %v193 = vld [vmem:[%s192] sm:$0xf]
    %v194 = vld [vmem:[%s192 + $0x4] sm:$0xf]
    %v195 = vld [vmem:[%s192 + $0x8] sm:$0xf]
    %v196 = vld [vmem:[%s192 + $0xc] sm:$0xf]
    %v197 = vld [vmem:[%s192 + $0x10] sm:$0xf]
    %v198 = vld [vmem:[%s192 + $0x14] sm:$0xf]
    %v199 = vld [vmem:[%s192 + $0x18] sm:$0xf]
    %v200 = vld [vmem:[%s192 + $0x1c] sm:$0xf]
    %v201 = vld [vmem:[%s192 + $0x20] sm:$0xf]
    %v202 = vld [vmem:[%s192 + $0x24] sm:$0xf]
    %v203 = vld [vmem:[%s192 + $0x28] sm:$0xf]
    %v204 = vld [vmem:[%s192 + $0x2c] sm:$0xf]
    %v205 = vld [vmem:[%s192 + $0x30] sm:$0xf]
    %v206 = vld [vmem:[%s192 + $0x34] sm:$0xf]
    %v207 = vld [vmem:[%s192 + $0x38] sm:$0xf]
    %v208 = vld [vmem:[%s192 + $0x3c] sm:$0xf]
    %v209 = vlaneseq
    %v210 = vshrl.u32 %v209, 7
    %v211 = vsub.s32 0, %v210
    %v212 = vrot.slane %v189, %v211
    %v229 = vunpack.c.l.b16 %v193
    %v230 = vunpack.c.l.b16 %v194
    %v231 = vunpack.c.l.b16 %v195
    %v232 = vunpack.c.l.b16 %v196
    %v233 = vunpack.c.l.b16 %v197
    %v234 = vunpack.c.l.b16 %v198
    %v235 = vunpack.c.l.b16 %v199
    %v236 = vunpack.c.l.b16 %v200
    %v237 = vunpack.c.l.b16 %v201
    %v238 = vunpack.c.l.b16 %v202
    %v239 = vunpack.c.l.b16 %v203
    %v240 = vunpack.c.l.b16 %v204
    %v241 = vunpack.c.l.b16 %v205
    %v242 = vunpack.c.l.b16 %v206
    %v243 = vunpack.c.l.b16 %v207
    %v244 = vunpack.c.l.b16 %v208
    %v245 = vpack.c.b16 %v230, %v229
    %v246 = vpack.c.b16 %v232, %v231
    %v247 = vpack.c.b16 %v234, %v233
    %v248 = vpack.c.b16 %v236, %v235
    %v249 = vpack.c.b16 %v238, %v237
    %v250 = vpack.c.b16 %v240, %v239
    %v251 = vpack.c.b16 %v242, %v241
    %v252 = vpack.c.b16 %v244, %v243
    %261 = vmatprep.subr.bf16.mxu0 0
    %262 = vmatpush1.bf16.msra.mxu0 %v245
    %263 = vmatprep.subr.bf16.mxu0 0
    %264 = vmatpush1.bf16.msra.mxu0 %v246
    %265 = vmatprep.subr.bf16.mxu0 0
    %266 = vmatpush1.bf16.msra.mxu0 %v247
    %267 = vmatprep.subr.bf16.mxu0 0
    %268 = vmatpush1.bf16.msra.mxu0 %v248
    %269 = vmatprep.subr.bf16.mxu0 0
    %270 = vmatpush1.bf16.msra.mxu0 %v249
    %271 = vmatprep.subr.bf16.mxu0 0
    %272 = vmatpush1.bf16.msra.mxu0 %v250
    %273 = vmatprep.subr.bf16.mxu0 0
    %274 = vmatpush1.bf16.msra.mxu0 %v251
    %275 = vmatprep.subr.bf16.mxu0 0
    %276 = vmatpush1.bf16.msra.mxu0 %v252
    %277 = vmatprep.subr.bf16.mxu0 0
    %278 = vmatpush1.bf16.msra.mxu0 0
    %279 = vmatprep.subr.bf16.mxu0 0
    %280 = vmatpush1.bf16.msra.mxu0 0
    %281 = vmatprep.subr.bf16.mxu0 0
    %282 = vmatpush1.bf16.msra.mxu0 0
    %283 = vmatprep.subr.bf16.mxu0 0
    %284 = vmatpush1.bf16.msra.mxu0 0
    %285 = vmatprep.subr.bf16.mxu0 0
    %286 = vmatpush1.bf16.msra.mxu0 0
    %287 = vmatprep.subr.bf16.mxu0 0
    %288 = vmatpush1.bf16.msra.mxu0 0
    %289 = vmatprep.subr.bf16.mxu0 0
    %290 = vmatpush1.bf16.msra.mxu0 0
    %291 = vmatprep.subr.bf16.mxu0 0
    %292 = vmatpush1.bf16.msra.mxu0 0
    %293 = vmatprep.mubr.bf16.mxu0 0
    %294 = vmatmul.mubr.bf16.gmra.mrb[0].mxu0 %v191
    %v295 = vpop.f32.mrb[0].mxu0
    %v296 = vadd.f32 %v212, %v295
    %v297 = vpop.f32.mrb[0].mxu0
    %v298 = vpop.f32.mrb[0].mxu0
    %v299 = vpop.f32.mrb[0].mxu0
    %300 = vdwg.mxu0
    %v301 = vmax.f32 %v296, 0.0
    %v302 = vrot.slane %v301, 4
    %v303 = vadd.f32 %v301, %v302
    %v304 = vrot.slane %v303, 2
    %v305 = vadd.f32 %v303, %v304
    %v306 = vrot.slane %v305, 1
    %v307 = vadd.f32 %v305, %v306
    %v308 = vmul.f32 %v307, 0.125
    %v309 = vsub.f32 %v301, %v308
    %v310 = vmul.f32 %v309, %v309
    %v311 = vrot.slane %v310, 4
    %v312 = vadd.f32 %v310, %v311
    %v313 = vrot.slane %v312, 2
    %v314 = vadd.f32 %v312, %v313
    %v315 = vrot.slane %v314, 1
    %v316 = vadd.f32 %v314, %v315
    %v317 = vmul.f32 %v316, 0.125
    %v318 = vadd.f32 %v317, 1e-05
    %v319 = vrsqrt.pop %v318
    %v320 = vmul.f32 %v309, %v319
    %v321 = vlaneseq
    %v322 = vshrl.u32 %v321, 7
    %v323 = vsub.s32 1, %v322
    %v324 = vrot.slane %v189, %v323
    %v325 = vmul.f32 %v320, %v324
    %v326 = vlaneseq
    %v327 = vshrl.u32 %v326, 7
    %v328 = vsub.s32 2, %v327
    %v329 = vrot.slane %v189, %v328
    %v330 = vadd.f32 %v325, %v329
    %331 = vst [vmem:[#allocation2] sm:$0xff] %v330
    %s332 = scalar_lea.vmem [#allocation6], 16
    %v333 = vld [vmem:[%s332] sm:$0xff]
    %v334 = vld [vmem:[#allocation2] sm:$0xff]
    %v335 = vpack.c.bf16 %v334, %v334
    %s336 = scalar_lea.vmem [#allocation3], 128
    %v337 = vld [vmem:[%s336] sm:$0xf]
    %v338 = vld [vmem:[%s336 + $0x4] sm:$0xf]
    %v339 = vld [vmem:[%s336 + $0x8] sm:$0xf]
    %v340 = vld [vmem:[%s336 + $0xc] sm:$0xf]
    %v341 = vld [vmem:[%s336 + $0x10] sm:$0xf]
    %v342 = vld [vmem:[%s336 + $0x14] sm:$0xf]
    %v343 = vld [vmem:[%s336 + $0x18] sm:$0xf]
    %v344 = vld [vmem:[%s336 + $0x1c] sm:$0xf]
    %v345 = vld [vmem:[%s336 + $0x20] sm:$0xf]
    %v346 = vld [vmem:[%s336 + $0x24] sm:$0xf]
    %v347 = vld [vmem:[%s336 + $0x28] sm:$0xf]
    %v348 = vld [vmem:[%s336 + $0x2c] sm:$0xf]
    %v349 = vld [vmem:[%s336 + $0x30] sm:$0xf]
    %v350 = vld [vmem:[%s336 + $0x34] sm:$0xf]
    %v351 = vld [vmem:[%s336 + $0x38] sm:$0xf]
    %v352 = vld [vmem:[%s336 + $0x3c] sm:$0xf]
    %v353 = vlaneseq
    %v354 = vshrl.u32 %v353, 7
    %v355 = vsub.s32 0, %v354
    %v356 = vrot.slane %v333, %v355
    %v373 = vunpack.c.l.b16 %v337
    %v374 = vunpack.c.l.b16 %v338
    %v375 = vunpack.c.l.b16 %v339
    %v376 = vunpack.c.l.b16 %v340
    %v377 = vunpack.c.l.b16 %v341
    %v378 = vunpack.c.l.b16 %v342
    %v379 = vunpack.c.l.b16 %v343
    %v380 = vunpack.c.l.b16 %v344
    %v381 = vunpack.c.l.b16 %v345
    %v382 = vunpack.c.l.b16 %v346
    %v383 = vunpack.c.l.b16 %v347
    %v384 = vunpack.c.l.b16 %v348
    %v385 = vunpack.c.l.b16 %v349
    %v386 = vunpack.c.l.b16 %v350
    %v387 = vunpack.c.l.b16 %v351
    %v388 = vunpack.c.l.b16 %v352
    %v389 = vpack.c.b16 %v374, %v373
    %v390 = vpack.c.b16 %v376, %v375
    %v391 = vpack.c.b16 %v378, %v377
    %v392 = vpack.c.b16 %v380, %v379
    %v393 = vpack.c.b16 %v382, %v381
    %v394 = vpack.c.b16 %v384, %v383
    %v395 = vpack.c.b16 %v386, %v385
    %v396 = vpack.c.b16 %v388, %v387
    %405 = vmatprep.subr.bf16.mxu0 0
    %406 = vmatpush1.bf16.msra.mxu0 %v389
    %407 = vmatprep.subr.bf16.mxu0 0
    %408 = vmatpush1.bf16.msra.mxu0 %v390
    %409 = vmatprep.subr.bf16.mxu0 0
    %410 = vmatpush1.bf16.msra.mxu0 %v391
    %411 = vmatprep.subr.bf16.mxu0 0
    %412 = vmatpush1.bf16.msra.mxu0 %v392
    %413 = vmatprep.subr.bf16.mxu0 0
    %414 = vmatpush1.bf16.msra.mxu0 %v393
    %415 = vmatprep.subr.bf16.mxu0 0
    %416 = vmatpush1.bf16.msra.mxu0 %v394
    %417 = vmatprep.subr.bf16.mxu0 0
    %418 = vmatpush1.bf16.msra.mxu0 %v395
    %419 = vmatprep.subr.bf16.mxu0 0
    %420 = vmatpush1.bf16.msra.mxu0 %v396
    %421 = vmatprep.subr.bf16.mxu0 0
    %422 = vmatpush1.bf16.msra.mxu0 0
    %423 = vmatprep.subr.bf16.mxu0 0
    %424 = vmatpush1.bf16.msra.mxu0 0
    %425 = vmatprep.subr.bf16.mxu0 0
    %426 = vmatpush1.bf16.msra.mxu0 0
    %427 = vmatprep.subr.bf16.mxu0 0
    %428 = vmatpush1.bf16.msra.mxu0 0
    %429 = vmatprep.subr.bf16.mxu0 0
    %430 = vmatpush1.bf16.msra.mxu0 0
    %431 = vmatprep.subr.bf16.mxu0 0
    %432 = vmatpush1.bf16.msra.mxu0 0
    %433 = vmatprep.subr.bf16.mxu0 0
    %434 = vmatpush1.bf16.msra.mxu0 0
    %435 = vmatprep.subr.bf16.mxu0 0
    %436 = vmatpush1.bf16.msra.mxu0 0
    %437 = vmatprep.mubr.bf16.mxu0 0
    %438 = vmatmul.mubr.bf16.gmra.mrb[0].mxu0 %v335
    %v439 = vpop.f32.mrb[0].mxu0
    %v440 = vadd.f32 %v356, %v439
    %v441 = vpop.f32.mrb[0].mxu0
    %v442 = vpop.f32.mrb[0].mxu0
    %v443 = vpop.f32.mrb[0].mxu0
    %444 = vdwg.mxu0
    %v445 = vmax.f32 %v440, 0.0
    %v446 = vrot.slane %v445, 4
    %v447 = vadd.f32 %v445, %v446
    %v448 = vrot.slane %v447, 2
    %v449 = vadd.f32 %v447, %v448
    %v450 = vrot.slane %v449, 1
    %v451 = vadd.f32 %v449, %v450
    %v452 = vmul.f32 %v451, 0.125
    %v453 = vsub.f32 %v445, %v452
    %v454 = vmul.f32 %v453, %v453
    %v455 = vrot.slane %v454, 4
    %v456 = vadd.f32 %v454, %v455
    %v457 = vrot.slane %v456, 2
    %v458 = vadd.f32 %v456, %v457
    %v459 = vrot.slane %v458, 1
    %v460 = vadd.f32 %v458, %v459
    %v461 = vmul.f32 %v460, 0.125
    %v462 = vadd.f32 %v461, 1e-05
    %v463 = vrsqrt.pop %v462
    %v464 = vmul.f32 %v453, %v463
    %v465 = vlaneseq
    %v466 = vshrl.u32 %v465, 7
    %v467 = vsub.s32 1, %v466
    %v468 = vrot.slane %v333, %v467
    %v469 = vmul.f32 %v464, %v468
    %v470 = vlaneseq
    %v471 = vshrl.u32 %v470, 7
    %v472 = vsub.s32 2, %v471
    %v473 = vrot.slane %v333, %v472
    %v474 = vadd.f32 %v469, %v473
    %475 = vst [vmem:[#allocation2] sm:$0xff] %v474
    %v476 = vld [vmem:[#allocation2] sm:$0xff]
    %v477 = vpack.c.bf16 %v476, %v476
    %s478 = scalar_lea.vmem [#allocation3], 192
    %v479 = vld [vmem:[%s478] sm:$0xf]
    %v480 = vld [vmem:[%s478 + $0x4] sm:$0xf]
    %v481 = vld [vmem:[%s478 + $0x8] sm:$0xf]
    %v482 = vld [vmem:[%s478 + $0xc] sm:$0xf]
    %v483 = vld [vmem:[%s478 + $0x10] sm:$0xf]
    %v484 = vld [vmem:[%s478 + $0x14] sm:$0xf]
    %v485 = vld [vmem:[%s478 + $0x18] sm:$0xf]
    %v486 = vld [vmem:[%s478 + $0x1c] sm:$0xf]
    %v487 = vld [vmem:[%s478 + $0x20] sm:$0xf]
    %v488 = vld [vmem:[%s478 + $0x24] sm:$0xf]
    %v489 = vld [vmem:[%s478 + $0x28] sm:$0xf]
    %v490 = vld [vmem:[%s478 + $0x2c] sm:$0xf]
    %v491 = vld [vmem:[%s478 + $0x30] sm:$0xf]
    %v492 = vld [vmem:[%s478 + $0x34] sm:$0xf]
    %v493 = vld [vmem:[%s478 + $0x38] sm:$0xf]
    %v494 = vld [vmem:[%s478 + $0x3c] sm:$0xf]
    %s495 = scalar_lea.vmem [#allocation6], 24
    %v496 = vld [vmem:[%s495] sm:$0x1]
    %v497 = vlaneseq
    %v498 = vshrl.u32 %v497, 7
    %v499 = vsub.s32 0, %v498
    %v500 = vrot.slane %v496, %v499
    %v517 = vunpack.c.l.b16 %v479
    %v518 = vunpack.c.l.b16 %v480
    %v519 = vunpack.c.l.b16 %v481
    %v520 = vunpack.c.l.b16 %v482
    %v521 = vunpack.c.l.b16 %v483
    %v522 = vunpack.c.l.b16 %v484
    %v523 = vunpack.c.l.b16 %v485
    %v524 = vunpack.c.l.b16 %v486
    %v525 = vunpack.c.l.b16 %v487
    %v526 = vunpack.c.l.b16 %v488
    %v527 = vunpack.c.l.b16 %v489
    %v528 = vunpack.c.l.b16 %v490
    %v529 = vunpack.c.l.b16 %v491
    %v530 = vunpack.c.l.b16 %v492
    %v531 = vunpack.c.l.b16 %v493
    %v532 = vunpack.c.l.b16 %v494
    %v533 = vpack.c.b16 %v518, %v517
    %v534 = vpack.c.b16 %v520, %v519
    %v535 = vpack.c.b16 %v522, %v521
    %v536 = vpack.c.b16 %v524, %v523
    %v537 = vpack.c.b16 %v526, %v525
    %v538 = vpack.c.b16 %v528, %v527
    %v539 = vpack.c.b16 %v530, %v529
    %v540 = vpack.c.b16 %v532, %v531
    %549 = vmatprep.subr.bf16.mxu0 0
    %550 = vmatpush1.bf16.msra.mxu0 %v533
    %551 = vmatprep.subr.bf16.mxu0 0
    %552 = vmatpush1.bf16.msra.mxu0 %v534
    %553 = vmatprep.subr.bf16.mxu0 0
    %554 = vmatpush1.bf16.msra.mxu0 %v535
    %555 = vmatprep.subr.bf16.mxu0 0
    %556 = vmatpush1.bf16.msra.mxu0 %v536
    %557 = vmatprep.subr.bf16.mxu0 0
    %558 = vmatpush1.bf16.msra.mxu0 %v537
    %559 = vmatprep.subr.bf16.mxu0 0
    %560 = vmatpush1.bf16.msra.mxu0 %v538
    %561 = vmatprep.subr.bf16.mxu0 0
    %562 = vmatpush1.bf16.msra.mxu0 %v539
    %563 = vmatprep.subr.bf16.mxu0 0
    %564 = vmatpush1.bf16.msra.mxu0 %v540
    %565 = vmatprep.subr.bf16.mxu0 0
    %566 = vmatpush1.bf16.msra.mxu0 0
    %567 = vmatprep.subr.bf16.mxu0 0
    %568 = vmatpush1.bf16.msra.mxu0 0
    %569 = vmatprep.subr.bf16.mxu0 0
    %570 = vmatpush1.bf16.msra.mxu0 0
    %571 = vmatprep.subr.bf16.mxu0 0
    %572 = vmatpush1.bf16.msra.mxu0 0
    %573 = vmatprep.subr.bf16.mxu0 0
    %574 = vmatpush1.bf16.msra.mxu0 0
    %575 = vmatprep.subr.bf16.mxu0 0
    %576 = vmatpush1.bf16.msra.mxu0 0
    %577 = vmatprep.subr.bf16.mxu0 0
    %578 = vmatpush1.bf16.msra.mxu0 0
    %579 = vmatprep.subr.bf16.mxu0 0
    %580 = vmatpush1.bf16.msra.mxu0 0
    %581 = vmatprep.mubr.bf16.mxu0 0
    %582 = vmatmul.mubr.bf16.gmra.mrb[0].mxu0 %v477
    %v583 = vpop.f32.mrb[0].mxu0
    %v584 = vadd.f32 %v500, %v583
    %v585 = vpop.f32.mrb[0].mxu0
    %v586 = vpop.f32.mrb[0].mxu0
    %v587 = vpop.f32.mrb[0].mxu0
    %588 = vdwg.mxu0
    %589 = vst [vmem:[#allocation8] sm:$0xff] %v584
    // Predicated region
    $region22: #{mlp_forward.1} parent=1 // pred_check
      _
    $region23: #{mlp_forward.1} parent=1 // pred_check_branch
      %591 = sbr.rel (0) target = $region25
    $region24: #{mlp_forward.1} parent=1 // pred_region
      %s593 = ssub.s32 128, 128
      %594 = vsyncadd [#allocation5], %s593
      %s596 = sshll.u32 [#allocation8], 4
      %s597 = int_to_ptr.vmem [resolvable:$true] %s596
      %599 = dma.vmem_to_hbm [thread:$0]  %s597, 128, %s3, [#allocation5]
    $region25: #{mlp_forward.1} parent=1 // pred_fallthru
      _
    // Predicated region
    $region26: #{mlp_forward.1} parent=1 // pred_check
      _
    $region27: #{mlp_forward.1} parent=1 // pred_check_branch
      %601 = sbr.rel (0) target = $region29
    $region28: #{mlp_forward.1} parent=1 // pred_region
      %602 = dma.done [#allocation5], 128
    $region29: #{mlp_forward.1} parent=1 // pred_fallthru
      _
    %603 = vsyncpa [#allocation4], 1
    %604 = vsyncpa [#allocation7], 1
    %605 = vsyncpa [#allocation5], 1

</llo_original>
